<compile_context>
chip_gen: v7x
topology: tpu7x:2x2x1
jax: 0.10.0
libtpu: 0.0.40
codegen_flags: <defaults>
</compile_context>

<pallas_src>
import math

import jax
import jax.numpy as jnp
from jax import lax
from jax.experimental import pallas as pl
from jax.experimental.pallas import tpu as pltpu

# ----- small, module-consistent config -----
B, S = 2, 8            # batch, sequence length
D = 32                 # d_model
H, DK = 4, 8           # num_heads, d_kv
INNER = H * DK         # inner_dim (= 32)
D_FF = 64              # d_ff
NUM_BUCKETS = 32       # relative_attention_num_buckets
MAX_DISTANCE = 128
EPS = 1e-6             # layer_norm_epsilon
BS = B * S
NEG_INF = -1e9         # cross-batch mask fill (exp underflows to exactly 0)


# =============================== Pallas kernel ===============================

def _t5_block_kernel(x_ref, ln1_ref, wqkv_ref, wo_ref, bias_ref,
                     ln2_ref, wi_ref, wo2_ref, o_ref,
                     q_sc, k_sc, v_sc, ctx_sc):
    """Fused T5Block (self-attention layer + FF layer) over the whole batch.

    x_ref    : (BS, D)        f32   hidden states (batch folded into rows)
    ln1_ref  : (1, D)         f32   attention-layer RMS-norm weight
    wqkv_ref : (D, 3*INNER)   bf16  fused [Wq | Wk | Wv]
    wo_ref   : (INNER, D)     bf16  attention output projection
    bias_ref : (H, BS, BS)    f32   rel-pos bias tiled over batch, -1e9 on
                                    cross-batch (b != b') key positions
    ln2_ref  : (1, D)         f32   FF-layer RMS-norm weight
    wi_ref   : (D, D_FF)      bf16  FF in-projection
    wo2_ref  : (D_FF, D)      bf16  FF out-projection
    o_ref    : (BS, D)        f32   output hidden states
    q_sc/k_sc/v_sc : (H, BS, DK) bf16 VMEM scratch (head-stacked q/k/v)
    ctx_sc   : (BS, INNER)    bf16  VMEM scratch (packed per-head context)
    """
    x = x_ref[...]                                        # (BS, D) f32

    # ---------------- T5LayerSelfAttention ----------------
    # T5LayerNorm: no mean subtraction, no bias; rsqrt on the EUP.
    var = jnp.mean(x * x, axis=-1, keepdims=True)
    nx = x * lax.rsqrt(var + EPS) * ln1_ref[...]

    # Fused Q/K/V projection: one MXU stream (bf16 inputs, f32 accumulate).
    qkv = jnp.dot(nx.astype(jnp.bfloat16), wqkv_ref[...],
                  preferred_element_type=jnp.float32)     # (BS, 3*INNER)
    qkv16 = qkv.astype(jnp.bfloat16)

    # Head-stack q/k/v into (H, BS, DK) scratches via static lane slices +
    # plain slice stores (cheap vst; the only way to move the head index from
    # lanes to a leading batch axis without a risky in-register relayout).
    for h in range(H):
        q_sc[h] = qkv16[:, h * DK:(h + 1) * DK]
        k_sc[h] = qkv16[:, INNER + h * DK:INNER + (h + 1) * DK]
        v_sc[h] = qkv16[:, 2 * INNER + h * DK:2 * INNER + (h + 1) * DK]

    qa = q_sc[...]                                        # (H, BS, DK) bf16
    ka = k_sc[...]
    va = v_sc[...]

    # One head-batched score einsum (T5 has no 1/sqrt(dk) scaling).
    # Rows/cols are (b*S + position); cross-batch pairs are masked to -1e9 in
    # bias_ref, so exp() underflows to exactly 0 and they contribute nothing.
    s = jnp.einsum('hrd,hcd->hrc', qa, ka,
                   preferred_element_type=jnp.float32)    # (H, BS, BS) f32
    s = s + bias_ref[...]

    # Single softmax chain for all heads (f32); denominator recip on the EUP.
    s = s - jnp.max(s, axis=-1, keepdims=True)
    p = jnp.exp(s)
    p = p * pl.reciprocal(jnp.sum(p, axis=-1, keepdims=True), approx=True)

    ctx = jnp.einsum('hrc,hcd->hrd', p.astype(jnp.bfloat16), va,
                     preferred_element_type=jnp.float32)  # (H, BS, DK) f32
    ctx16 = ctx.astype(jnp.bfloat16)

    # Assemble packed context (BS, INNER) with lane-slice stores, then ONE
    # K=INNER matmul against Wo (instead of four K=DK matmuls).
    for h in range(H):
        ctx_sc[:, h * DK:(h + 1) * DK] = ctx16[h]

    attn = jnp.dot(ctx_sc[...], wo_ref[...],
                   preferred_element_type=jnp.float32)    # (BS, D)

    x = x + attn                                          # residual (dropout = identity)

    # --------------------- T5LayerFF ---------------------
    var2 = jnp.mean(x * x, axis=-1, keepdims=True)
    nx2 = x * lax.rsqrt(var2 + EPS) * ln2_ref[...]
    h1 = jnp.dot(nx2.astype(jnp.bfloat16), wi_ref[...],
                 preferred_element_type=jnp.float32)      # (BS, D_FF)
    h1 = jnp.maximum(h1, 0.0)                             # ReLU
    y = jnp.dot(h1.astype(jnp.bfloat16), wo2_ref[...],
                preferred_element_type=jnp.float32)       # (BS, D)

    # TODO(synk): output last dim is 32 (<128 lanes -> masked vst); a (4,128)
    # lane-dense repack needs an in-kernel relayout that isn't worth it here.
    o_ref[...] = x + y                                    # residual (dropout = identity)


# ===================== one-time setup glue (plain JAX) ========================

def _relative_position_bucket(relative_position, bidirectional=True,
                              num_buckets=32, max_distance=128):
    ret = jnp.zeros_like(relative_position)
    n = -relative_position
    if bidirectional:
        num_buckets //= 2
        ret = ret + (n < 0).astype(jnp.int32) * num_buckets
        n = jnp.abs(n)
    else:
        n = jnp.maximum(n, 0)
    max_exact = num_buckets // 2
    is_small = n < max_exact
    val_if_large = max_exact + (
        jnp.log(jnp.maximum(n, 1).astype(jnp.float32) / max_exact)
        / math.log(max_distance / max_exact)
        * (num_buckets - max_exact)
    ).astype(jnp.int32)
    val_if_large = jnp.minimum(val_if_large, num_buckets - 1)
    ret = ret + jnp.where(is_small, n, val_if_large)
    return ret


def compute_position_bias(qlen, klen, rel_bias_emb, is_decoder=False):
    context_position = jnp.arange(qlen, dtype=jnp.int32)[:, None]
    memory_position = jnp.arange(klen, dtype=jnp.int32)[None, :]
    relative_position = memory_position - context_position
    rp_bucket = _relative_position_bucket(
        relative_position, bidirectional=not is_decoder,
        num_buckets=NUM_BUCKETS, max_distance=MAX_DISTANCE)
    values = rel_bias_emb[rp_bucket]                        # (qlen, klen, H)
    values = jnp.transpose(values, (2, 0, 1))[None, :, :, :]  # (1, H, qlen, klen)
    return values


def prepare_t5_block(params):
    """One-time preprocessing: everything shape-static is done here, NOT in the
    per-call forward path (weight fusion/casts, bias gather, packing, masking)."""
    position_bias = compute_position_bias(S, S, params["rel_bias"])   # (1,H,S,S)
    pb = position_bias[0]                                             # (H,S,S)

    # Tile bias over the folded batch rows/cols and mask cross-batch pairs.
    bias_tiled = jnp.tile(pb, (1, B, B))                               # (H,BS,BS)
    bidx = jnp.arange(BS, dtype=jnp.int32) // S
    same_batch = (bidx[:, None] == bidx[None, :])                      # (BS,BS)
    bias_masked = jnp.where(same_batch[None, :, :], bias_tiled,
                            jnp.float32(NEG_INF)).astype(jnp.float32)

    wqkv = jnp.concatenate(
        [params["wq"], params["wk"], params["wv"]], axis=1).astype(jnp.bfloat16)

    return {
        "ln_attn": params["ln_attn"].astype(jnp.float32),
        "wqkv": wqkv,                                                  # (D, 3*INNER) bf16
        "wo": params["wo"].astype(jnp.bfloat16),                       # (INNER, D)
        "bias_masked": bias_masked,                                    # (H, BS, BS) f32
        "ln_ff": params["ln_ff"].astype(jnp.float32),
        "wi": params["ff_wi"].astype(jnp.bfloat16),                    # (D, D_FF)
        "wo2": params["ff_wo"].astype(jnp.bfloat16),                   # (D_FF, D)
        "position_bias": position_bias,                                # (1, H, S, S)
    }


# ============================== block wrapper =================================

_FLOPS = (2 * BS * D * 3 * INNER        # qkv
          + 2 * H * BS * BS * DK        # scores
          + 2 * H * BS * BS * DK        # context
          + 2 * BS * INNER * D          # wo
          + 2 * BS * D * D_FF           # wi
          + 2 * BS * D_FF * D)          # wo2
_TRANS = H * BS * BS + 2 * BS           # exp + rsqrt/recip
_BYTES = (2 * BS * D * 4                # x in + out
          + 2 * D * 4                   # layer norms
          + D * 3 * INNER * 2 + INNER * D * 2
          + H * BS * BS * 4
          + D * D_FF * 2 + D_FF * D * 2)


def t5_block_forward(hidden_states, prepared):
    """Hot path: only reshape(bitcast) -> single fused pallas_call -> reshape.
    Returns (hidden_states, position_bias) like the PyTorch T5Block with
    is_decoder=False, has_relative_attention_bias=True, attention_mask=None."""
    x2d = hidden_states.reshape(BS, D)

    vmem = pl.BlockSpec(memory_space=pltpu.MemorySpace.VMEM)
    out2d = pl.pallas_call(
        _t5_block_kernel,
        out_shape=jax.ShapeDtypeStruct((BS, D), jnp.float32),
        in_specs=[vmem] * 8,
        out_specs=vmem,
        scratch_shapes=[
            pltpu.VMEM((H, BS, DK), jnp.bfloat16),   # q (head-stacked)
            pltpu.VMEM((H, BS, DK), jnp.bfloat16),   # k
            pltpu.VMEM((H, BS, DK), jnp.bfloat16),   # v
            pltpu.VMEM((BS, INNER), jnp.bfloat16),   # packed context
        ],
        cost_estimate=pl.CostEstimate(
            flops=_FLOPS, transcendentals=_TRANS, bytes_accessed=_BYTES),
    )(x2d, prepared["ln_attn"], prepared["wqkv"], prepared["wo"],
      prepared["bias_masked"], prepared["ln_ff"], prepared["wi"],
      prepared["wo2"])

    return out2d.reshape(B, S, D), prepared["position_bias"]


# ====================== pure-JAX reference (for checking) =====================

def _rms_norm_ref(x, w):
    var = jnp.mean(x * x, axis=-1, keepdims=True)
    return (x / jnp.sqrt(var + EPS)) * w


def t5_block_ref(x, params):
    pos_bias = compute_position_bias(S, S, params["rel_bias"])
    nx = _rms_norm_ref(x, params["ln_attn"])
    q = (nx @ params["wq"]).reshape(B, S, H, DK).transpose(0, 2, 1, 3)
    k = (nx @ params["wk"]).reshape(B, S, H, DK).transpose(0, 2, 1, 3)
    v = (nx @ params["wv"]).reshape(B, S, H, DK).transpose(0, 2, 1, 3)
    scores = jnp.einsum("bhqd,bhkd->bhqk", q, k) + pos_bias
    w = jax.nn.softmax(scores, axis=-1)
    ctx = jnp.einsum("bhqk,bhkd->bhqd", w, v)
    ctx = ctx.transpose(0, 2, 1, 3).reshape(B, S, INNER)
    x = x + ctx @ params["wo"]
    nx = _rms_norm_ref(x, params["ln_ff"])
    y = jnp.maximum(nx @ params["ff_wi"], 0.0) @ params["ff_wo"]
    return x + y, pos_bias


# ================================== main ======================================

def make_params(key):
    ks = jax.random.split(key, 9)
    scale = 0.05
    return {
        "ln_attn": 1.0 + 0.1 * jax.random.normal(ks[7], (1, D), jnp.float32),
        "wq": scale * jax.random.normal(ks[0], (D, INNER), jnp.float32),
        "wk": scale * jax.random.normal(ks[1], (D, INNER), jnp.float32),
        "wv": scale * jax.random.normal(ks[2], (D, INNER), jnp.float32),
        "wo": scale * jax.random.normal(ks[3], (INNER, D), jnp.float32),
        "rel_bias": 0.1 * jax.random.normal(ks[4], (NUM_BUCKETS, H), jnp.float32),
        "ln_ff": 1.0 + 0.1 * jax.random.normal(ks[8], (1, D), jnp.float32),
        "ff_wi": scale * jax.random.normal(ks[5], (D, D_FF), jnp.float32),
        "ff_wo": scale * jax.random.normal(ks[6], (D_FF, D), jnp.float32),
    }


if __name__ == "__main__":
    key = jax.random.PRNGKey(0)
    k_x, k_p = jax.random.split(key)
    x = jax.random.normal(k_x, (B, S, D), jnp.float32)
    params = make_params(k_p)

    # One-time setup (outside the hot path): weight fusion, bf16 casts, bias.
    prepared = prepare_t5_block(params)

    fwd = jax.jit(t5_block_forward)
    out, pos_bias = fwd(x, prepared)
    jax.block_until_ready(out)
    jax.block_until_ready(pos_bias)

    ref_out, ref_bias = t5_block_ref(x, params)
    assert out.shape == (B, S, D)
    assert pos_bias.shape == (1, H, S, S)
    assert jnp.allclose(pos_bias, ref_bias, atol=1e-5, rtol=1e-5)
    # bf16 MXU inputs with f32 accumulation -> compare against the f32
    # reference with a tolerance covering bf16 input rounding.
    max_err = float(jnp.max(jnp.abs(out - ref_out)))
    assert jnp.allclose(out, ref_out, atol=1e-2, rtol=1e-2), max_err

    print("KERNEL_OK")
</pallas_src>

<mosaic_0001>
module attributes {stable_mosaic.version = 11 : i64} {
  func.func @_t5_block_kernel(%arg0: memref<16x32xf32, #tpu.memory_space<vmem>>, %arg1: memref<1x32xf32, #tpu.memory_space<vmem>>, %arg2: memref<32x96xbf16, #tpu.memory_space<vmem>>, %arg3: memref<32x32xbf16, #tpu.memory_space<vmem>>, %arg4: memref<4x16x16xf32, #tpu.memory_space<vmem>>, %arg5: memref<1x32xf32, #tpu.memory_space<vmem>>, %arg6: memref<32x64xbf16, #tpu.memory_space<vmem>>, %arg7: memref<64x32xbf16, #tpu.memory_space<vmem>>, %arg8: memref<16x32xf32, #tpu.memory_space<vmem>>, %arg9: memref<4x16x8xbf16, #tpu.memory_space<vmem>>, %arg10: memref<4x16x8xbf16, #tpu.memory_space<vmem>>, %arg11: memref<4x16x8xbf16, #tpu.memory_space<vmem>>, %arg12: memref<16x32xbf16, #tpu.memory_space<vmem>>) attributes {dimension_semantics = [], scalar_prefetch = 0 : i64, scratch_operands = 4 : i64, tpu.core_type = #tpu.core_type<tc>} {
    %c0 = arith.constant 0 : index
    %c0_0 = arith.constant 0 : index
    %0 = vector.load %arg0[%c0, %c0_0] : memref<16x32xf32, #tpu.memory_space<vmem>>, vector<16x32xf32>
    %1 = arith.mulf %0, %0 : vector<16x32xf32>
    %cst = arith.constant dense<0.000000e+00> : vector<16xf32>
    %2 = vector.multi_reduction <add>, %1, %cst [1] : vector<16x32xf32> to vector<16xf32>
    %3 = vector.shape_cast %2 : vector<16xf32> to vector<16x1xf32>
    %cst_1 = arith.constant 3.200000e+01 : f32
    %4 = vector.broadcast %cst_1 : f32 to vector<16x1xf32>
    %5 = arith.divf %3, %4 : vector<16x1xf32>
    %cst_2 = arith.constant 9.99999997E-7 : f32
    %6 = vector.broadcast %cst_2 : f32 to vector<16x1xf32>
    %7 = arith.addf %5, %6 : vector<16x1xf32>
    %8 = math.rsqrt %7 : vector<16x1xf32>
    %9 = vector.broadcast %8 : vector<16x1xf32> to vector<16x32xf32>
    %10 = arith.mulf %0, %9 : vector<16x32xf32>
    %c0_3 = arith.constant 0 : index
    %c0_4 = arith.constant 0 : index
    %11 = vector.load %arg1[%c0_3, %c0_4] : memref<1x32xf32, #tpu.memory_space<vmem>>, vector<1x32xf32>
    %12 = vector.broadcast %11 : vector<1x32xf32> to vector<16x32xf32>
    %13 = arith.mulf %10, %12 : vector<16x32xf32>
    %14 = arith.truncf %13 : vector<16x32xf32> to vector<16x32xbf16>
    %c0_5 = arith.constant 0 : index
    %c0_6 = arith.constant 0 : index
    %15 = vector.load %arg2[%c0_5, %c0_6] : memref<32x96xbf16, #tpu.memory_space<vmem>>, vector<32x96xbf16>
    %cst_7 = arith.constant dense<0.000000e+00> : vector<16x96xf32>
    %16 = tpu.matmul %14, %15, %cst_7 {dimension_numbers = #tpu.dot_dimension_numbers<[1], [0], [0], [1], [0, 0, 1, 1], [], []>} : vector<16x32xbf16>, vector<32x96xbf16>, vector<16x96xf32> -> vector<16x96xf32>
    %17 = arith.truncf %16 : vector<16x96xf32> to vector<16x96xbf16>
    %18 = vector.extract_strided_slice %17 {offsets = [0, 0], sizes = [16, 8], strides = [1, 1]} : vector<16x96xbf16> to vector<16x8xbf16>
    %c0_8 = arith.constant 0 : index
    %c0_9 = arith.constant 0 : index
    %c0_10 = arith.constant 0 : index
    %19 = vector.load %arg9[%c0_8, %c0_9, %c0_10] : memref<4x16x8xbf16, #tpu.memory_space<vmem>>, vector<1x16x8xbf16>
    %20 = vector.shape_cast %19 : vector<1x16x8xbf16> to vector<16x8xbf16>
    %21 = vector.shape_cast %18 : vector<16x8xbf16> to vector<1x16x8xbf16>
    tpu.vector_store %arg9[%c0_8, %c0_9, %c0_10], %21 {strides = array<i32>} : memref<4x16x8xbf16, #tpu.memory_space<vmem>>, vector<1x16x8xbf16>,
    %22 = vector.extract_strided_slice %17 {offsets = [0, 32], sizes = [16, 8], strides = [1, 1]} : vector<16x96xbf16> to vector<16x8xbf16>
    %c0_11 = arith.constant 0 : index
    %c0_12 = arith.constant 0 : index
    %c0_13 = arith.constant 0 : index
    %23 = vector.load %arg10[%c0_11, %c0_12, %c0_13] : memref<4x16x8xbf16, #tpu.memory_space<vmem>>, vector<1x16x8xbf16>
    %24 = vector.shape_cast %23 : vector<1x16x8xbf16> to vector<16x8xbf16>
    %25 = vector.shape_cast %22 : vector<16x8xbf16> to vector<1x16x8xbf16>
    tpu.vector_store %arg10[%c0_11, %c0_12, %c0_13], %25 {strides = array<i32>} : memref<4x16x8xbf16, #tpu.memory_space<vmem>>, vector<1x16x8xbf16>,
    %26 = vector.extract_strided_slice %17 {offsets = [0, 64], sizes = [16, 8], strides = [1, 1]} : vector<16x96xbf16> to vector<16x8xbf16>
    %c0_14 = arith.constant 0 : index
    %c0_15 = arith.constant 0 : index
    %c0_16 = arith.constant 0 : index
    %27 = vector.load %arg11[%c0_14, %c0_15, %c0_16] : memref<4x16x8xbf16, #tpu.memory_space<vmem>>, vector<1x16x8xbf16>
    %28 = vector.shape_cast %27 : vector<1x16x8xbf16> to vector<16x8xbf16>
    %29 = vector.shape_cast %26 : vector<16x8xbf16> to vector<1x16x8xbf16>
    tpu.vector_store %arg11[%c0_14, %c0_15, %c0_16], %29 {strides = array<i32>} : memref<4x16x8xbf16, #tpu.memory_space<vmem>>, vector<1x16x8xbf16>,
    %30 = vector.extract_strided_slice %17 {offsets = [0, 8], sizes = [16, 8], strides = [1, 1]} : vector<16x96xbf16> to vector<16x8xbf16>
    %c1 = arith.constant 1 : index
    %c0_17 = arith.constant 0 : index
    %c0_18 = arith.constant 0 : index
    %31 = vector.load %arg9[%c1, %c0_17, %c0_18] : memref<4x16x8xbf16, #tpu.memory_space<vmem>>, vector<1x16x8xbf16>
    %32 = vector.shape_cast %31 : vector<1x16x8xbf16> to vector<16x8xbf16>
    %33 = vector.shape_cast %30 : vector<16x8xbf16> to vector<1x16x8xbf16>
    tpu.vector_store %arg9[%c1, %c0_17, %c0_18], %33 {strides = array<i32>} : memref<4x16x8xbf16, #tpu.memory_space<vmem>>, vector<1x16x8xbf16>,
    %34 = vector.extract_strided_slice %17 {offsets = [0, 40], sizes = [16, 8], strides = [1, 1]} : vector<16x96xbf16> to vector<16x8xbf16>
    %c1_19 = arith.constant 1 : index
    %c0_20 = arith.constant 0 : index
    %c0_21 = arith.constant 0 : index
    %35 = vector.load %arg10[%c1_19, %c0_20, %c0_21] : memref<4x16x8xbf16, #tpu.memory_space<vmem>>, vector<1x16x8xbf16>
    %36 = vector.shape_cast %35 : vector<1x16x8xbf16> to vector<16x8xbf16>
    %37 = vector.shape_cast %34 : vector<16x8xbf16> to vector<1x16x8xbf16>
    tpu.vector_store %arg10[%c1_19, %c0_20, %c0_21], %37 {strides = array<i32>} : memref<4x16x8xbf16, #tpu.memory_space<vmem>>, vector<1x16x8xbf16>,
    %38 = vector.extract_strided_slice %17 {offsets = [0, 72], sizes = [16, 8], strides = [1, 1]} : vector<16x96xbf16> to vector<16x8xbf16>
    %c1_22 = arith.constant 1 : index
    %c0_23 = arith.constant 0 : index
    %c0_24 = arith.constant 0 : index
    %39 = vector.load %arg11[%c1_22, %c0_23, %c0_24] : memref<4x16x8xbf16, #tpu.memory_space<vmem>>, vector<1x16x8xbf16>
    %40 = vector.shape_cast %39 : vector<1x16x8xbf16> to vector<16x8xbf16>
    %41 = vector.shape_cast %38 : vector<16x8xbf16> to vector<1x16x8xbf16>
    tpu.vector_store %arg11[%c1_22, %c0_23, %c0_24], %41 {strides = array<i32>} : memref<4x16x8xbf16, #tpu.memory_space<vmem>>, vector<1x16x8xbf16>,
    %42 = vector.extract_strided_slice %17 {offsets = [0, 16], sizes = [16, 8], strides = [1, 1]} : vector<16x96xbf16> to vector<16x8xbf16>
    %c2 = arith.constant 2 : index
    %c0_25 = arith.constant 0 : index
    %c0_26 = arith.constant 0 : index
    %43 = vector.load %arg9[%c2, %c0_25, %c0_26] : memref<4x16x8xbf16, #tpu.memory_space<vmem>>, vector<1x16x8xbf16>
    %44 = vector.shape_cast %43 : vector<1x16x8xbf16> to vector<16x8xbf16>
    %45 = vector.shape_cast %42 : vector<16x8xbf16> to vector<1x16x8xbf16>
    tpu.vector_store %arg9[%c2, %c0_25, %c0_26], %45 {strides = array<i32>} : memref<4x16x8xbf16, #tpu.memory_space<vmem>>, vector<1x16x8xbf16>,
    %46 = vector.extract_strided_slice %17 {offsets = [0, 48], sizes = [16, 8], strides = [1, 1]} : vector<16x96xbf16> to vector<16x8xbf16>
    %c2_27 = arith.constant 2 : index
    %c0_28 = arith.constant 0 : index
    %c0_29 = arith.constant 0 : index
    %47 = vector.load %arg10[%c2_27, %c0_28, %c0_29] : memref<4x16x8xbf16, #tpu.memory_space<vmem>>, vector<1x16x8xbf16>
    %48 = vector.shape_cast %47 : vector<1x16x8xbf16> to vector<16x8xbf16>
    %49 = vector.shape_cast %46 : vector<16x8xbf16> to vector<1x16x8xbf16>
    tpu.vector_store %arg10[%c2_27, %c0_28, %c0_29], %49 {strides = array<i32>} : memref<4x16x8xbf16, #tpu.memory_space<vmem>>, vector<1x16x8xbf16>,
    %50 = vector.extract_strided_slice %17 {offsets = [0, 80], sizes = [16, 8], strides = [1, 1]} : vector<16x96xbf16> to vector<16x8xbf16>
    %c2_30 = arith.constant 2 : index
    %c0_31 = arith.constant 0 : index
    %c0_32 = arith.constant 0 : index
    %51 = vector.load %arg11[%c2_30, %c0_31, %c0_32] : memref<4x16x8xbf16, #tpu.memory_space<vmem>>, vector<1x16x8xbf16>
    %52 = vector.shape_cast %51 : vector<1x16x8xbf16> to vector<16x8xbf16>
    %53 = vector.shape_cast %50 : vector<16x8xbf16> to vector<1x16x8xbf16>
    tpu.vector_store %arg11[%c2_30, %c0_31, %c0_32], %53 {strides = array<i32>} : memref<4x16x8xbf16, #tpu.memory_space<vmem>>, vector<1x16x8xbf16>,
    %54 = vector.extract_strided_slice %17 {offsets = [0, 24], sizes = [16, 8], strides = [1, 1]} : vector<16x96xbf16> to vector<16x8xbf16>
    %c3 = arith.constant 3 : index
    %c0_33 = arith.constant 0 : index
    %c0_34 = arith.constant 0 : index
    %55 = vector.load %arg9[%c3, %c0_33, %c0_34] : memref<4x16x8xbf16, #tpu.memory_space<vmem>>, vector<1x16x8xbf16>
    %56 = vector.shape_cast %55 : vector<1x16x8xbf16> to vector<16x8xbf16>
    %57 = vector.shape_cast %54 : vector<16x8xbf16> to vector<1x16x8xbf16>
    tpu.vector_store %arg9[%c3, %c0_33, %c0_34], %57 {strides = array<i32>} : memref<4x16x8xbf16, #tpu.memory_space<vmem>>, vector<1x16x8xbf16>,
    %58 = vector.extract_strided_slice %17 {offsets = [0, 56], sizes = [16, 8], strides = [1, 1]} : vector<16x96xbf16> to vector<16x8xbf16>
    %c3_35 = arith.constant 3 : index
    %c0_36 = arith.constant 0 : index
    %c0_37 = arith.constant 0 : index
    %59 = vector.load %arg10[%c3_35, %c0_36, %c0_37] : memref<4x16x8xbf16, #tpu.memory_space<vmem>>, vector<1x16x8xbf16>
    %60 = vector.shape_cast %59 : vector<1x16x8xbf16> to vector<16x8xbf16>
    %61 = vector.shape_cast %58 : vector<16x8xbf16> to vector<1x16x8xbf16>
    tpu.vector_store %arg10[%c3_35, %c0_36, %c0_37], %61 {strides = array<i32>} : memref<4x16x8xbf16, #tpu.memory_space<vmem>>, vector<1x16x8xbf16>,
    %62 = vector.extract_strided_slice %17 {offsets = [0, 88], sizes = [16, 8], strides = [1, 1]} : vector<16x96xbf16> to vector<16x8xbf16>
    %c3_38 = arith.constant 3 : index
    %c0_39 = arith.constant 0 : index
    %c0_40 = arith.constant 0 : index
    %63 = vector.load %arg11[%c3_38, %c0_39, %c0_40] : memref<4x16x8xbf16, #tpu.memory_space<vmem>>, vector<1x16x8xbf16>
    %64 = vector.shape_cast %63 : vector<1x16x8xbf16> to vector<16x8xbf16>
    %65 = vector.shape_cast %62 : vector<16x8xbf16> to vector<1x16x8xbf16>
    tpu.vector_store %arg11[%c3_38, %c0_39, %c0_40], %65 {strides = array<i32>} : memref<4x16x8xbf16, #tpu.memory_space<vmem>>, vector<1x16x8xbf16>,
    %c0_41 = arith.constant 0 : index
    %c0_42 = arith.constant 0 : index
    %c0_43 = arith.constant 0 : index
    %66 = vector.load %arg9[%c0_41, %c0_42, %c0_43] : memref<4x16x8xbf16, #tpu.memory_space<vmem>>, vector<4x16x8xbf16>
    %c0_44 = arith.constant 0 : index
    %c0_45 = arith.constant 0 : index
    %c0_46 = arith.constant 0 : index
    %67 = vector.load %arg10[%c0_44, %c0_45, %c0_46] : memref<4x16x8xbf16, #tpu.memory_space<vmem>>, vector<4x16x8xbf16>
    %c0_47 = arith.constant 0 : index
    %c0_48 = arith.constant 0 : index
    %c0_49 = arith.constant 0 : index
    %68 = vector.load %arg11[%c0_47, %c0_48, %c0_49] : memref<4x16x8xbf16, #tpu.memory_space<vmem>>, vector<4x16x8xbf16>
    "tpu.trace_start"() <{level = 10 : i32, message = "hrd,hcd->hrc"}> : () -> ()
    %cst_50 = arith.constant dense<0.000000e+00> : vector<4x16x16xf32>
    %69 = tpu.matmul %66, %67, %cst_50 {dimension_numbers = #tpu.dot_dimension_numbers<[2], [2], [1], [1], [0, 0, 0, 1, 1, 1], [0], [0]>} : vector<4x16x8xbf16>, vector<4x16x8xbf16>, vector<4x16x16xf32> -> vector<4x16x16xf32>
    "tpu.trace_stop"() : () -> ()
    %c0_51 = arith.constant 0 : index
    %c0_52 = arith.constant 0 : index
    %c0_53 = arith.constant 0 : index
    %70 = vector.load %arg4[%c0_51, %c0_52, %c0_53] : memref<4x16x16xf32, #tpu.memory_space<vmem>>, vector<4x16x16xf32>
    %71 = arith.addf %69, %70 : vector<4x16x16xf32>
    %cst_54 = arith.constant dense<0xFF800000> : vector<4x16xf32>
    %72 = vector.multi_reduction <maximumf>, %71, %cst_54 [2] : vector<4x16x16xf32> to vector<4x16xf32>
    %73 = vector.shape_cast %72 : vector<4x16xf32> to vector<4x16x1xf32>
    %74 = vector.broadcast %73 : vector<4x16x1xf32> to vector<4x16x16xf32>
    %75 = arith.subf %71, %74 : vector<4x16x16xf32>
    %76 = math.exp %75 : vector<4x16x16xf32>
    %cst_55 = arith.constant dense<0.000000e+00> : vector<4x16xf32>
    %77 = vector.multi_reduction <add>, %76, %cst_55 [2] : vector<4x16x16xf32> to vector<4x16xf32>
    %78 = vector.shape_cast %77 : vector<4x16xf32> to vector<4x16x1xf32>
    %79 = tpu.reciprocal %78 {approx = true} : vector<4x16x1xf32> -> vector<4x16x1xf32>
    %80 = vector.broadcast %79 : vector<4x16x1xf32> to vector<4x16x16xf32>
    %81 = arith.mulf %76, %80 : vector<4x16x16xf32>
    %82 = arith.truncf %81 : vector<4x16x16xf32> to vector<4x16x16xbf16>
    "tpu.trace_start"() <{level = 10 : i32, message = "hrc,hcd->hrd"}> : () -> ()
    %cst_56 = arith.constant dense<0.000000e+00> : vector<4x16x8xf32>
    %83 = tpu.matmul %82, %68, %cst_56 {dimension_numbers = #tpu.dot_dimension_numbers<[2], [1], [1], [2], [0, 0, 0, 1, 1, 2], [0], [0]>} : vector<4x16x16xbf16>, vector<4x16x8xbf16>, vector<4x16x8xf32> -> vector<4x16x8xf32>
    "tpu.trace_stop"() : () -> ()
    %84 = arith.truncf %83 : vector<4x16x8xf32> to vector<4x16x8xbf16>
    %85 = vector.extract_strided_slice %84 {offsets = [0, 0, 0], sizes = [1, 16, 8], strides = [1, 1, 1]} : vector<4x16x8xbf16> to vector<1x16x8xbf16>
    %86 = vector.shape_cast %85 : vector<1x16x8xbf16> to vector<16x8xbf16>
    %c0_57 = arith.constant 0 : index
    %c0_58 = arith.constant 0 : index
    %87 = vector.load %arg12[%c0_57, %c0_58] : memref<16x32xbf16, #tpu.memory_space<vmem>>, vector<16x8xbf16>
    tpu.vector_store %arg12[%c0_57, %c0_58], %86 {strides = array<i32>} : memref<16x32xbf16, #tpu.memory_space<vmem>>, vector<16x8xbf16>,
    %88 = vector.extract_strided_slice %84 {offsets = [1, 0, 0], sizes = [1, 16, 8], strides = [1, 1, 1]} : vector<4x16x8xbf16> to vector<1x16x8xbf16>
    %89 = vector.shape_cast %88 : vector<1x16x8xbf16> to vector<16x8xbf16>
    %c0_59 = arith.constant 0 : index
    %c8 = arith.constant 8 : index
    %90 = vector.load %arg12[%c0_59, %c8] : memref<16x32xbf16, #tpu.memory_space<vmem>>, vector<16x8xbf16>
    tpu.vector_store %arg12[%c0_59, %c8], %89 {strides = array<i32>} : memref<16x32xbf16, #tpu.memory_space<vmem>>, vector<16x8xbf16>,
    %91 = vector.extract_strided_slice %84 {offsets = [2, 0, 0], sizes = [1, 16, 8], strides = [1, 1, 1]} : vector<4x16x8xbf16> to vector<1x16x8xbf16>
    %92 = vector.shape_cast %91 : vector<1x16x8xbf16> to vector<16x8xbf16>
    %c0_60 = arith.constant 0 : index
    %c16 = arith.constant 16 : index
    %93 = vector.load %arg12[%c0_60, %c16] : memref<16x32xbf16, #tpu.memory_space<vmem>>, vector<16x8xbf16>
    tpu.vector_store %arg12[%c0_60, %c16], %92 {strides = array<i32>} : memref<16x32xbf16, #tpu.memory_space<vmem>>, vector<16x8xbf16>,
    %94 = vector.extract_strided_slice %84 {offsets = [3, 0, 0], sizes = [1, 16, 8], strides = [1, 1, 1]} : vector<4x16x8xbf16> to vector<1x16x8xbf16>
    %95 = vector.shape_cast %94 : vector<1x16x8xbf16> to vector<16x8xbf16>
    %c0_61 = arith.constant 0 : index
    %c24 = arith.constant 24 : index
    %96 = vector.load %arg12[%c0_61, %c24] : memref<16x32xbf16, #tpu.memory_space<vmem>>, vector<16x8xbf16>
    tpu.vector_store %arg12[%c0_61, %c24], %95 {strides = array<i32>} : memref<16x32xbf16, #tpu.memory_space<vmem>>, vector<16x8xbf16>,
    %c0_62 = arith.constant 0 : index
    %c0_63 = arith.constant 0 : index
    %97 = vector.load %arg12[%c0_62, %c0_63] : memref<16x32xbf16, #tpu.memory_space<vmem>>, vector<16x32xbf16>
    %c0_64 = arith.constant 0 : index
    %c0_65 = arith.constant 0 : index
    %98 = vector.load %arg3[%c0_64, %c0_65] : memref<32x32xbf16, #tpu.memory_space<vmem>>, vector<32x32xbf16>
    %cst_66 = arith.constant dense<0.000000e+00> : vector<16x32xf32>
    %99 = tpu.matmul %97, %98, %cst_66 {dimension_numbers = #tpu.dot_dimension_numbers<[1], [0], [0], [1], [0, 0, 1, 1], [], []>} : vector<16x32xbf16>, vector<32x32xbf16>, vector<16x32xf32> -> vector<16x32xf32>
    %100 = arith.addf %0, %99 : vector<16x32xf32>
    %101 = arith.mulf %100, %100 : vector<16x32xf32>
    %cst_67 = arith.constant dense<0.000000e+00> : vector<16xf32>
    %102 = vector.multi_reduction <add>, %101, %cst_67 [1] : vector<16x32xf32> to vector<16xf32>
    %103 = vector.shape_cast %102 : vector<16xf32> to vector<16x1xf32>
    %cst_68 = arith.constant 3.200000e+01 : f32
    %104 = vector.broadcast %cst_68 : f32 to vector<16x1xf32>
    %105 = arith.divf %103, %104 : vector<16x1xf32>
    %cst_69 = arith.constant 9.99999997E-7 : f32
    %106 = vector.broadcast %cst_69 : f32 to vector<16x1xf32>
    %107 = arith.addf %105, %106 : vector<16x1xf32>
    %108 = math.rsqrt %107 : vector<16x1xf32>
    %109 = vector.broadcast %108 : vector<16x1xf32> to vector<16x32xf32>
    %110 = arith.mulf %100, %109 : vector<16x32xf32>
    %c0_70 = arith.constant 0 : index
    %c0_71 = arith.constant 0 : index
    %111 = vector.load %arg5[%c0_70, %c0_71] : memref<1x32xf32, #tpu.memory_space<vmem>>, vector<1x32xf32>
    %112 = vector.broadcast %111 : vector<1x32xf32> to vector<16x32xf32>
    %113 = arith.mulf %110, %112 : vector<16x32xf32>
    %114 = arith.truncf %113 : vector<16x32xf32> to vector<16x32xbf16>
    %c0_72 = arith.constant 0 : index
    %c0_73 = arith.constant 0 : index
    %115 = vector.load %arg6[%c0_72, %c0_73] : memref<32x64xbf16, #tpu.memory_space<vmem>>, vector<32x64xbf16>
    %cst_74 = arith.constant dense<0.000000e+00> : vector<16x64xf32>
    %116 = tpu.matmul %114, %115, %cst_74 {dimension_numbers = #tpu.dot_dimension_numbers<[1], [0], [0], [1], [0, 0, 1, 1], [], []>} : vector<16x32xbf16>, vector<32x64xbf16>, vector<16x64xf32> -> vector<16x64xf32>
    %cst_75 = arith.constant 0.000000e+00 : f32
    %117 = vector.broadcast %cst_75 : f32 to vector<16x64xf32>
    %118 = arith.maximumf %116, %117 : vector<16x64xf32>
    %119 = arith.truncf %118 : vector<16x64xf32> to vector<16x64xbf16>
    %c0_76 = arith.constant 0 : index
    %c0_77 = arith.constant 0 : index
    %120 = vector.load %arg7[%c0_76, %c0_77] : memref<64x32xbf16, #tpu.memory_space<vmem>>, vector<64x32xbf16>
    %cst_78 = arith.constant dense<0.000000e+00> : vector<16x32xf32>
    %121 = tpu.matmul %119, %120, %cst_78 {dimension_numbers = #tpu.dot_dimension_numbers<[1], [0], [0], [1], [0, 0, 1, 1], [], []>} : vector<16x64xbf16>, vector<64x32xbf16>, vector<16x32xf32> -> vector<16x32xf32>
    %122 = arith.addf %100, %121 : vector<16x32xf32>
    %c0_79 = arith.constant 0 : index
    %c0_80 = arith.constant 0 : index
    %123 = vector.load %arg8[%c0_79, %c0_80] : memref<16x32xf32, #tpu.memory_space<vmem>>, vector<16x32xf32>
    tpu.vector_store %arg8[%c0_79, %c0_80], %122 {strides = array<i32>} : memref<16x32xf32, #tpu.memory_space<vmem>>, vector<16x32xf32>,
    return
  }
}

</mosaic_0001>

<llo_original>
// kernel: t5_block_forward.1
$region0: #{t5_block_forward.1}
  #allocation0 [shape = 'u32[]', space=smem, size = 0x4, offset = 0x4, fixed_abs, tag = 'smem constant byte address 0x4 - core index']
  #allocation1 [shape = 'u32[144,128]{1,0:T(1,128)}', space=vmem, size = 0x12000, scoped, tag = 'internal scratch']
  #allocation2 [shape = 'bf16[4,16,8]{2,1,0:T(16,128)(2,1)}', space=vmem, size = 0x4000, scoped, tag = 'scratch operand']
  #allocation3 [shape = 'bf16[4,16,8]{2,1,0:T(16,128)(2,1)}', space=vmem, size = 0x4000, scoped, tag = 'scratch operand']
  #allocation4 [shape = 'bf16[4,16,8]{2,1,0:T(16,128)(2,1)}', space=vmem, size = 0x4000, scoped, tag = 'scratch operand']
  #allocation5 [shape = 'bf16[16,32]{1,0:T(16,128)(2,1)}', space=vmem, size = 0x1000, scoped, tag = 'scratch operand']
  %s0 = inlined_call_operand.hbm [shape: f32[16,32], index: 0, kind: input, shape index: {}]
  %s1 = inlined_call_operand.vmem [shape: f32[1,32], index: 1, kind: input, shape index: {}]
  %s2 = inlined_call_operand.hbm [shape: bf16[32,96], index: 2, kind: input, shape index: {}]
  %s3 = inlined_call_operand.hbm [shape: bf16[32,32], index: 3, kind: input, shape index: {}]
  %s4 = inlined_call_operand.vmem [shape: f32[4,16,16], index: 4, kind: input, shape index: {}]
  %s5 = inlined_call_operand.vmem [shape: f32[1,32], index: 5, kind: input, shape index: {}]
  %s6 = inlined_call_operand.hbm [shape: bf16[32,64], index: 6, kind: input, shape index: {}]
  %s7 = inlined_call_operand.vmem [shape: bf16[64,32], index: 7, kind: input, shape index: {}]
  %s8 = inlined_call_operand.hbm [shape: f32[16,32], index: 8, kind: output, shape index: {}]
  %s9 = sld [smem:[#allocation0]]
  $region58: #{t5_block_forward.1} parent=0
    _
  %s11 = ssub.s32 1, %s9
  %s12 = scalar_select 0, %s11, %s9
  $region1: #{t5_block_forward.1} parent=0
    #allocation6 [shape = 'u8[8192]{0}', space=vmem, size = 0x2000, scoped, tag = 'input window, operand 0, single buffered']
    #allocation7 [shape = 's32[1]{0}', space=sflag, size = 0x4, scoped, tag = 'scoped memory for t5_block_forward.1']
    #allocation8 [shape = 's32[1]{0}', space=sflag, size = 0x4, scoped, tag = 'scoped memory for t5_block_forward.1']
    #allocation9 [shape = 'u8[8192]{0}', space=vmem, size = 0x2000, scoped, tag = 'input window, operand 2, single buffered']
    #allocation10 [shape = 's32[1]{0}', space=sflag, size = 0x4, scoped, tag = 'scoped memory for t5_block_forward.1']
    #allocation11 [shape = 'u8[8192]{0}', space=vmem, size = 0x2000, scoped, tag = 'input window, operand 3, single buffered']
    #allocation12 [shape = 'u8[8192]{0}', space=vmem, size = 0x2000, scoped, tag = 'input window, operand 6, single buffered']
    #allocation13 [shape = 's32[1]{0}', space=sflag, size = 0x4, scoped, tag = 'scoped memory for t5_block_forward.1']
    #allocation14 [shape = 'u8[8192]{0}', space=vmem, size = 0x2000, scoped, tag = 'output window, operand 0, single buffered']
    %13 = vsyncpa [#allocation7], 0
    %14 = vsyncpa [#allocation10], 0
    %15 = vsyncpa [#allocation13], 0
    %16 = vsyncpa [#allocation8], 0
    // Predicated region
    $region2: #{t5_block_forward.1} parent=1 // pred_check
      _
    $region3: #{t5_block_forward.1} parent=1 // pred_check_branch
      %18 = sbr.rel (0) target = $region5
    $region4: #{t5_block_forward.1} parent=1 // pred_region
      %s20 = ssub.s32 256, 256
      %21 = vsyncadd [#allocation7], %s20
      %s22 = sshll.u32 [#allocation6], 4
      %s23 = int_to_ptr.vmem [resolvable:$true] %s22
      %28 = dma.hbm_to_vmem [thread:$0]  %s0, 256, %s23, [#allocation7], 128, 128, 8
    $region5: #{t5_block_forward.1} parent=1 // pred_fallthru
      _
    // Predicated region
    $region6: #{t5_block_forward.1} parent=1 // pred_check
      _
    $region7: #{t5_block_forward.1} parent=1 // pred_check_branch
      %30 = sbr.rel (0) target = $region9
    $region8: #{t5_block_forward.1} parent=1 // pred_region
      _
    $region9: #{t5_block_forward.1} parent=1 // pred_fallthru
      _
    // Predicated region
    $region10: #{t5_block_forward.1} parent=1 // pred_check
      _
    $region11: #{t5_block_forward.1} parent=1 // pred_check_branch
      %32 = sbr.rel (0) target = $region13
    $region12: #{t5_block_forward.1} parent=1 // pred_region
      %s34 = ssub.s32 256, 256
      %35 = vsyncadd [#allocation10], %s34
      %s36 = sshll.u32 [#allocation9], 4
      %s37 = int_to_ptr.vmem [resolvable:$true] %s36
      %42 = dma.hbm_to_vmem [thread:$0]  %s2, 256, %s37, [#allocation10], 64, 64, 4
    $region13: #{t5_block_forward.1} parent=1 // pred_fallthru
      _
    // Predicated region
    $region14: #{t5_block_forward.1} parent=1 // pred_check
      _
    $region15: #{t5_block_forward.1} parent=1 // pred_check_branch
      %44 = sbr.rel (0) target = $region17
    $region16: #{t5_block_forward.1} parent=1 // pred_region
      %s46 = ssub.s32 256, 256
      %47 = vsyncadd [#allocation10], %s46
      %s48 = sshll.u32 [#allocation11], 4
      %s49 = int_to_ptr.vmem [resolvable:$true] %s48
      %54 = dma.hbm_to_vmem [thread:$0]  %s3, 256, %s49, [#allocation10], 64, 64, 4
    $region17: #{t5_block_forward.1} parent=1 // pred_fallthru
      _
    // Predicated region
    $region18: #{t5_block_forward.1} parent=1 // pred_check
      _
    $region19: #{t5_block_forward.1} parent=1 // pred_check_branch
      %56 = sbr.rel (0) target = $region21
    $region20: #{t5_block_forward.1} parent=1 // pred_region
      _
    $region21: #{t5_block_forward.1} parent=1 // pred_fallthru
      _
    // Predicated region
    $region22: #{t5_block_forward.1} parent=1 // pred_check
      _
    $region23: #{t5_block_forward.1} parent=1 // pred_check_branch
      %58 = sbr.rel (0) target = $region25
    $region24: #{t5_block_forward.1} parent=1 // pred_region
      _
    $region25: #{t5_block_forward.1} parent=1 // pred_fallthru
      _
    // Predicated region
    $region26: #{t5_block_forward.1} parent=1 // pred_check
      _
    $region27: #{t5_block_forward.1} parent=1 // pred_check_branch
      %60 = sbr.rel (0) target = $region29
    $region28: #{t5_block_forward.1} parent=1 // pred_region
      %s62 = ssub.s32 256, 256
      %63 = vsyncadd [#allocation13], %s62
      %s64 = sshll.u32 [#allocation12], 4
      %s65 = int_to_ptr.vmem [resolvable:$true] %s64
      %70 = dma.hbm_to_vmem [thread:$0]  %s6, 256, %s65, [#allocation13], 64, 64, 4
    $region29: #{t5_block_forward.1} parent=1 // pred_fallthru
      _
    // Predicated region
    $region30: #{t5_block_forward.1} parent=1 // pred_check
      _
    $region31: #{t5_block_forward.1} parent=1 // pred_check_branch
      %72 = sbr.rel (0) target = $region33
    $region32: #{t5_block_forward.1} parent=1 // pred_region
      _
    $region33: #{t5_block_forward.1} parent=1 // pred_fallthru
      _
    // Predicated region
    $region34: #{t5_block_forward.1} parent=1 // pred_check
      _
    $region35: #{t5_block_forward.1} parent=1 // pred_check_branch
      %74 = sbr.rel (0) target = $region37
    $region36: #{t5_block_forward.1} parent=1 // pred_region
      %75 = dma.done [#allocation7], 256
    $region37: #{t5_block_forward.1} parent=1 // pred_fallthru
      _
    // Predicated region
    $region38: #{t5_block_forward.1} parent=1 // pred_check
      _
    $region39: #{t5_block_forward.1} parent=1 // pred_check_branch
      %77 = sbr.rel (0) target = $region41
    $region40: #{t5_block_forward.1} parent=1 // pred_region
      %78 = dma.done [#allocation10], 256
    $region41: #{t5_block_forward.1} parent=1 // pred_fallthru
      _
    // Predicated region
    $region42: #{t5_block_forward.1} parent=1 // pred_check
      _
    $region43: #{t5_block_forward.1} parent=1 // pred_check_branch
      %80 = sbr.rel (0) target = $region45
    $region44: #{t5_block_forward.1} parent=1 // pred_region
      %81 = dma.done [#allocation10], 256
    $region45: #{t5_block_forward.1} parent=1 // pred_fallthru
      _
    // Predicated region
    $region46: #{t5_block_forward.1} parent=1 // pred_check
      _
    $region47: #{t5_block_forward.1} parent=1 // pred_check_branch
      %83 = sbr.rel (0) target = $region49
    $region48: #{t5_block_forward.1} parent=1 // pred_region
      %84 = dma.done [#allocation13], 256
    $region49: #{t5_block_forward.1} parent=1 // pred_fallthru
      _
    %v86 = vld [vmem:[#allocation6] sm:$0xff]
    %v87 = vld [vmem:[#allocation6 + $0x8] sm:$0xff]
    %v88 = vmul.f32 %v86, %v86
    %v89 = vmul.f32 %v87, %v87
    %vm90 = vcmask 261120
    %v91 = vsel %vm90, %v88, 0.0
    %92 = vadd.xlane.f32.xlu0 %v91
    %v93 = vpop.xlane.xlu0 %92
    %v94 = vsel %vm90, %v89, 0.0
    %95 = vadd.xlane.f32.xlu0 %v94
    %v96 = vpop.xlane.xlu0 %95
    %v97 = vrcp.pop 32.0
    %v98 = vmul.f32 %v93, %v97
    %v99 = vmul.f32 %v96, %v97
    %v100 = vadd.f32 %v98, 1e-06
    %v101 = vadd.f32 %v99, 1e-06
    %v102 = vrsqrt.pop %v100
    %v103 = vrsqrt.pop %v101
    %v104 = vmul.f32 %v86, %v102
    %v105 = vmul.f32 %v87, %v103
    %v106 = vld [vmem:[%s1] sm:$0x1]
    %v108 = vlaneseq
    %v109 = vshrl.u32 %v108, 7
    %v110 = vsub.s32 0, %v109
    %v111 = vrot.slane %v106, %v110
    %v113 = vmul.f32 %v104, %v111
    %v114 = vmul.f32 %v105, %v111
    %v115 = vpack.c.bf16 %v114, %v113
    %v116 = vld [vmem:[#allocation9] sm:$0xf]
    %v117 = vld [vmem:[#allocation9 + $0x4] sm:$0xf]
    %v118 = vld [vmem:[#allocation9 + $0x8] sm:$0xf]
    %v119 = vld [vmem:[#allocation9 + $0xc] sm:$0xf]
    %v124 = vunpack.c.l.b16 %v116
    %v125 = vunpack.c.l.b16 %v117
    %v126 = vunpack.c.l.b16 %v118
    %v127 = vunpack.c.l.b16 %v119
    %v128 = vpack.c.b16 %v125, %v124
    %v129 = vpack.c.b16 %v127, %v126
    %v133 = vsel %vm90, %v115, 0
    %135 = vmatprep.subr.bf16.mxu0 0
    %136 = vmatpush1.bf16.msra.mxu0 %v128
    %137 = vmatprep.subr.bf16.mxu0 0
    %138 = vmatpush1.bf16.msra.mxu0 %v129
    %139 = vmatprep.subr.bf16.mxu0 0
    %140 = vmatpush1.bf16.msra.mxu0 0
    %141 = vmatprep.subr.bf16.mxu0 0
    %142 = vmatpush1.bf16.msra.mxu0 0
    %143 = vmatprep.subr.bf16.mxu0 0
    %144 = vmatpush1.bf16.msra.mxu0 0
    %145 = vmatprep.subr.bf16.mxu0 0
    %146 = vmatpush1.bf16.msra.mxu0 0
    %147 = vmatprep.subr.bf16.mxu0 0
    %148 = vmatpush1.bf16.msra.mxu0 0
    %149 = vmatprep.subr.bf16.mxu0 0
    %150 = vmatpush1.bf16.msra.mxu0 0
    %151 = vmatprep.subr.bf16.mxu0 0
    %152 = vmatpush1.bf16.msra.mxu0 0
    %153 = vmatprep.subr.bf16.mxu0 0
    %154 = vmatpush1.bf16.msra.mxu0 0
    %155 = vmatprep.subr.bf16.mxu0 0
    %156 = vmatpush1.bf16.msra.mxu0 0
    %157 = vmatprep.subr.bf16.mxu0 0
    %158 = vmatpush1.bf16.msra.mxu0 0
    %159 = vmatprep.subr.bf16.mxu0 0
    %160 = vmatpush1.bf16.msra.mxu0 0
    %161 = vmatprep.subr.bf16.mxu0 0
    %162 = vmatpush1.bf16.msra.mxu0 0
    %163 = vmatprep.subr.bf16.mxu0 0
    %164 = vmatpush1.bf16.msra.mxu0 0
    %165 = vmatprep.subr.bf16.mxu0 0
    %166 = vmatpush1.bf16.msra.mxu0 0
    %167 = vmatprep.mubr.bf16.mxu0 0
    %168 = vmatmul.mubr.bf16.gmra.mrb[0].mxu0 %v133
    %v169 = vpop.f32.mrb[0].mxu0
    %v170 = vadd.f32 0.0, %v169
    %v171 = vpop.f32.mrb[0].mxu0
    %v172 = vpop.f32.mrb[0].mxu0
    %v173 = vadd.f32 0.0, %v172
    %v174 = vpop.f32.mrb[0].mxu0
    %175 = vdwg.mxu0
    %v176 = vpack.c.bf16 %v173, %v170
    %vm177 = vcmask 64512
    %178 = vst.msk [vmem:[#allocation2] sm:$0xff] %vm177, %v176
    %180 = vrot.lane.b32.xlu0 %v176, 96
    %v181 = vpop.permute.xlu0 %180
    %183 = vst.msk [vmem:[#allocation3] sm:$0xff] %vm177, %v181
    %184 = vrot.lane.b32.xlu0 %v176, 64
    %v185 = vpop.permute.xlu0 %184
    %187 = vst.msk [vmem:[#allocation4] sm:$0xff] %vm177, %v185
    %188 = vrot.lane.b32.xlu0 %v176, 120
    %v189 = vpop.permute.xlu0 %188
    %s191 = scalar_lea.vmem [#allocation2], 8
    %192 = vst.msk [vmem:[%s191] sm:$0xff] %vm177, %v189
    %193 = vrot.lane.b32.xlu0 %v176, 88
    %v194 = vpop.permute.xlu0 %193
    %s196 = scalar_lea.vmem [#allocation3], 8
    %197 = vst.msk [vmem:[%s196] sm:$0xff] %vm177, %v194
    %198 = vrot.lane.b32.xlu0 %v176, 56
    %v199 = vpop.permute.xlu0 %198
    %s201 = scalar_lea.vmem [#allocation4], 8
    %202 = vst.msk [vmem:[%s201] sm:$0xff] %vm177, %v199
    %203 = vrot.lane.b32.xlu0 %v176, 112
    %v204 = vpop.permute.xlu0 %203
    %s206 = scalar_lea.vmem [#allocation2], 16
    %207 = vst.msk [vmem:[%s206] sm:$0xff] %vm177, %v204
    %208 = vrot.lane.b32.xlu0 %v176, 80
    %v209 = vpop.permute.xlu0 %208
    %s211 = scalar_lea.vmem [#allocation3], 16
    %212 = vst.msk [vmem:[%s211] sm:$0xff] %vm177, %v209
    %213 = vrot.lane.b32.xlu0 %v176, 48
    %v214 = vpop.permute.xlu0 %213
    %s216 = scalar_lea.vmem [#allocation4], 16
    %217 = vst.msk [vmem:[%s216] sm:$0xff] %vm177, %v214
    %218 = vrot.lane.b32.xlu0 %v176, 104
    %v219 = vpop.permute.xlu0 %218
    %s221 = scalar_lea.vmem [#allocation2], 24
    %222 = vst.msk [vmem:[%s221] sm:$0xff] %vm177, %v219
    %223 = vrot.lane.b32.xlu0 %v176, 72
    %v224 = vpop.permute.xlu0 %223
    %s226 = scalar_lea.vmem [#allocation3], 24
    %227 = vst.msk [vmem:[%s226] sm:$0xff] %vm177, %v224
    %228 = vrot.lane.b32.xlu0 %v176, 40
    %v229 = vpop.permute.xlu0 %228
    %s231 = scalar_lea.vmem [#allocation4], 24
    %232 = vst.msk [vmem:[%s231] sm:$0xff] %vm177, %v229
    %v233 = vld [vmem:[#allocation2] sm:$0xff]
    %v234 = vld [vmem:[#allocation2 + $0x8] sm:$0xff]
    %v235 = vld [vmem:[#allocation2 + $0x10] sm:$0xff]
    %v236 = vld [vmem:[#allocation2 + $0x18] sm:$0xff]
    %v237 = vld [vmem:[#allocation3] sm:$0xff]
    %v238 = vld [vmem:[#allocation3 + $0x8] sm:$0xff]
    %v239 = vld [vmem:[#allocation3 + $0x10] sm:$0xff]
    %v240 = vld [vmem:[#allocation3 + $0x18] sm:$0xff]
    %v241 = vld [vmem:[#allocation4] sm:$0xff]
    %v242 = vld [vmem:[#allocation4 + $0x8] sm:$0xff]
    %v243 = vld [vmem:[#allocation4 + $0x10] sm:$0xff]
    %v244 = vld [vmem:[#allocation4 + $0x18] sm:$0xff]
    %v245 = vld [vmem:[%s4] sm:$0xff]
    %v246 = vld [vmem:[%s4 + $0x8] sm:$0xff]
    %v247 = vld [vmem:[%s4 + $0x10] sm:$0xff]
    %v248 = vld [vmem:[%s4 + $0x18] sm:$0xff]
    %v249 = vld [vmem:[%s4 + $0x20] sm:$0xff]
    %v250 = vld [vmem:[%s4 + $0x28] sm:$0xff]
    %v251 = vld [vmem:[%s4 + $0x30] sm:$0xff]
    %v252 = vld [vmem:[%s4 + $0x38] sm:$0xff]
    %v254 = vsel %vm177, %v233, 0
    %v257 = vsel %vm177, %v237, 0
    %259 = vmatprep.subr.bf16.mxu0 0
    %260 = vmatpush1.bf16.xpose.msra.mxu0 %v257
    %261 = vmatprep.subr.bf16.mxu0 0
    %262 = vmatpush1.bf16.xpose.msra.mxu0 0
    %263 = vmatprep.subr.bf16.mxu0 0
    %264 = vmatpush1.bf16.xpose.msra.mxu0 0
    %265 = vmatprep.subr.bf16.mxu0 0
    %266 = vmatpush1.bf16.xpose.msra.mxu0 0
    %267 = vmatprep.subr.bf16.mxu0 0
    %268 = vmatpush1.bf16.xpose.msra.mxu0 0
    %269 = vmatprep.subr.bf16.mxu0 0
    %270 = vmatpush1.bf16.xpose.msra.mxu0 0
    %271 = vmatprep.subr.bf16.mxu0 0
    %272 = vmatpush1.bf16.xpose.msra.mxu0 0
    %273 = vmatprep.subr.bf16.mxu0 0
    %274 = vmatpush1.bf16.xpose.msra.mxu0 0
    %275 = vmatprep.subr.bf16.mxu0 0
    %276 = vmatpush1.bf16.xpose.msra.mxu0 0
    %277 = vmatprep.subr.bf16.mxu0 0
    %278 = vmatpush1.bf16.xpose.msra.mxu0 0
    %279 = vmatprep.subr.bf16.mxu0 0
    %280 = vmatpush1.bf16.xpose.msra.mxu0 0
    %281 = vmatprep.subr.bf16.mxu0 0
    %282 = vmatpush1.bf16.xpose.msra.mxu0 0
    %283 = vmatprep.subr.bf16.mxu0 0
    %284 = vmatpush1.bf16.xpose.msra.mxu0 0
    %285 = vmatprep.subr.bf16.mxu0 0
    %286 = vmatpush1.bf16.xpose.msra.mxu0 0
    %287 = vmatprep.subr.bf16.mxu0 0
    %288 = vmatpush1.bf16.xpose.msra.mxu0 0
    %289 = vmatprep.subr.bf16.mxu0 0
    %290 = vmatpush1.bf16.xpose.msra.mxu0 0
    %291 = vmatprep.mubr.bf16.mxu0 0
    %292 = vmatmul.mubr.bf16.gmra.mrb[0].mxu0 %v254
    %v293 = vpop.f32.mrb[0].mxu0
    %v294 = vadd.f32 %v245, %v293
    %v295 = vpop.f32.mrb[0].mxu0
    %v296 = vpop.f32.mrb[0].mxu0
    %v297 = vadd.f32 %v246, %v296
    %v298 = vpop.f32.mrb[0].mxu0
    %299 = vdwg.mxu0
    %v301 = vsel %vm177, %v234, 0
    %v304 = vsel %vm177, %v238, 0
    %306 = vmatprep.subr.bf16.mxu0 0
    %307 = vmatpush1.bf16.xpose.msra.mxu0 %v304
    %308 = vmatprep.subr.bf16.mxu0 0
    %309 = vmatpush1.bf16.xpose.msra.mxu0 0
    %310 = vmatprep.subr.bf16.mxu0 0
    %311 = vmatpush1.bf16.xpose.msra.mxu0 0
    %312 = vmatprep.subr.bf16.mxu0 0
    %313 = vmatpush1.bf16.xpose.msra.mxu0 0
    %314 = vmatprep.subr.bf16.mxu0 0
    %315 = vmatpush1.bf16.xpose.msra.mxu0 0
    %316 = vmatprep.subr.bf16.mxu0 0
    %317 = vmatpush1.bf16.xpose.msra.mxu0 0
    %318 = vmatprep.subr.bf16.mxu0 0
    %319 = vmatpush1.bf16.xpose.msra.mxu0 0
    %320 = vmatprep.subr.bf16.mxu0 0
    %321 = vmatpush1.bf16.xpose.msra.mxu0 0
    %322 = vmatprep.subr.bf16.mxu0 0
    %323 = vmatpush1.bf16.xpose.msra.mxu0 0
    %324 = vmatprep.subr.bf16.mxu0 0
    %325 = vmatpush1.bf16.xpose.msra.mxu0 0
    %326 = vmatprep.subr.bf16.mxu0 0
    %327 = vmatpush1.bf16.xpose.msra.mxu0 0
    %328 = vmatprep.subr.bf16.mxu0 0
    %329 = vmatpush1.bf16.xpose.msra.mxu0 0
    %330 = vmatprep.subr.bf16.mxu0 0
    %331 = vmatpush1.bf16.xpose.msra.mxu0 0
    %332 = vmatprep.subr.bf16.mxu0 0
    %333 = vmatpush1.bf16.xpose.msra.mxu0 0
    %334 = vmatprep.subr.bf16.mxu0 0
    %335 = vmatpush1.bf16.xpose.msra.mxu0 0
    %336 = vmatprep.subr.bf16.mxu0 0
    %337 = vmatpush1.bf16.xpose.msra.mxu0 0
    %338 = vmatprep.mubr.bf16.mxu0 0
    %339 = vmatmul.mubr.bf16.gmra.mrb[0].mxu0 %v301
    %v340 = vpop.f32.mrb[0].mxu0
    %v341 = vadd.f32 %v247, %v340
    %v342 = vpop.f32.mrb[0].mxu0
    %v343 = vpop.f32.mrb[0].mxu0
    %v344 = vadd.f32 %v248, %v343
    %v345 = vpop.f32.mrb[0].mxu0
    %346 = vdwg.mxu0
    %v348 = vsel %vm177, %v235, 0
    %v351 = vsel %vm177, %v239, 0
    %353 = vmatprep.subr.bf16.mxu0 0
    %354 = vmatpush1.bf16.xpose.msra.mxu0 %v351
    %355 = vmatprep.subr.bf16.mxu0 0
    %356 = vmatpush1.bf16.xpose.msra.mxu0 0
    %357 = vmatprep.subr.bf16.mxu0 0
    %358 = vmatpush1.bf16.xpose.msra.mxu0 0
    %359 = vmatprep.subr.bf16.mxu0 0
    %360 = vmatpush1.bf16.xpose.msra.mxu0 0
    %361 = vmatprep.subr.bf16.mxu0 0
    %362 = vmatpush1.bf16.xpose.msra.mxu0 0
    %363 = vmatprep.subr.bf16.mxu0 0
    %364 = vmatpush1.bf16.xpose.msra.mxu0 0
    %365 = vmatprep.subr.bf16.mxu0 0
    %366 = vmatpush1.bf16.xpose.msra.mxu0 0
    %367 = vmatprep.subr.bf16.mxu0 0
    %368 = vmatpush1.bf16.xpose.msra.mxu0 0
    %369 = vmatprep.subr.bf16.mxu0 0
    %370 = vmatpush1.bf16.xpose.msra.mxu0 0
    %371 = vmatprep.subr.bf16.mxu0 0
    %372 = vmatpush1.bf16.xpose.msra.mxu0 0
    %373 = vmatprep.subr.bf16.mxu0 0
    %374 = vmatpush1.bf16.xpose.msra.mxu0 0
    %375 = vmatprep.subr.bf16.mxu0 0
    %376 = vmatpush1.bf16.xpose.msra.mxu0 0
    %377 = vmatprep.subr.bf16.mxu0 0
    %378 = vmatpush1.bf16.xpose.msra.mxu0 0
    %379 = vmatprep.subr.bf16.mxu0 0
    %380 = vmatpush1.bf16.xpose.msra.mxu0 0
    %381 = vmatprep.subr.bf16.mxu0 0
    %382 = vmatpush1.bf16.xpose.msra.mxu0 0
    %383 = vmatprep.subr.bf16.mxu0 0
    %384 = vmatpush1.bf16.xpose.msra.mxu0 0
    %385 = vmatprep.mubr.bf16.mxu0 0
    %386 = vmatmul.mubr.bf16.gmra.mrb[0].mxu0 %v348
    %v387 = vpop.f32.mrb[0].mxu0
    %v388 = vadd.f32 %v249, %v387
    %v389 = vpop.f32.mrb[0].mxu0
    %v390 = vpop.f32.mrb[0].mxu0
    %v391 = vadd.f32 %v250, %v390
    %v392 = vpop.f32.mrb[0].mxu0
    %393 = vdwg.mxu0
    %v395 = vsel %vm177, %v236, 0
    %v398 = vsel %vm177, %v240, 0
    %400 = vmatprep.subr.bf16.mxu0 0
    %401 = vmatpush1.bf16.xpose.msra.mxu0 %v398
    %402 = vmatprep.subr.bf16.mxu0 0
    %403 = vmatpush1.bf16.xpose.msra.mxu0 0
    %404 = vmatprep.subr.bf16.mxu0 0
    %405 = vmatpush1.bf16.xpose.msra.mxu0 0
    %406 = vmatprep.subr.bf16.mxu0 0
    %407 = vmatpush1.bf16.xpose.msra.mxu0 0
    %408 = vmatprep.subr.bf16.mxu0 0
    %409 = vmatpush1.bf16.xpose.msra.mxu0 0
    %410 = vmatprep.subr.bf16.mxu0 0
    %411 = vmatpush1.bf16.xpose.msra.mxu0 0
    %412 = vmatprep.subr.bf16.mxu0 0
    %413 = vmatpush1.bf16.xpose.msra.mxu0 0
    %414 = vmatprep.subr.bf16.mxu0 0
    %415 = vmatpush1.bf16.xpose.msra.mxu0 0
    %416 = vmatprep.subr.bf16.mxu0 0
    %417 = vmatpush1.bf16.xpose.msra.mxu0 0
    %418 = vmatprep.subr.bf16.mxu0 0
    %419 = vmatpush1.bf16.xpose.msra.mxu0 0
    %420 = vmatprep.subr.bf16.mxu0 0
    %421 = vmatpush1.bf16.xpose.msra.mxu0 0
    %422 = vmatprep.subr.bf16.mxu0 0
    %423 = vmatpush1.bf16.xpose.msra.mxu0 0
    %424 = vmatprep.subr.bf16.mxu0 0
    %425 = vmatpush1.bf16.xpose.msra.mxu0 0
    %426 = vmatprep.subr.bf16.mxu0 0
    %427 = vmatpush1.bf16.xpose.msra.mxu0 0
    %428 = vmatprep.subr.bf16.mxu0 0
    %429 = vmatpush1.bf16.xpose.msra.mxu0 0
    %430 = vmatprep.subr.bf16.mxu0 0
    %431 = vmatpush1.bf16.xpose.msra.mxu0 0
    %432 = vmatprep.mubr.bf16.mxu0 0
    %433 = vmatmul.mubr.bf16.gmra.mrb[0].mxu0 %v395
    %v434 = vpop.f32.mrb[0].mxu0
    %v435 = vadd.f32 %v251, %v434
    %v436 = vpop.f32.mrb[0].mxu0
    %v437 = vpop.f32.mrb[0].mxu0
    %v438 = vadd.f32 %v252, %v437
    %v439 = vpop.f32.mrb[0].mxu0
    %440 = vdwg.mxu0
    %vm441 = vcmask 130048
    %v442 = vsel %vm441, %v294, -inf
    %443 = vmax.xlane.f32.xlu0 %v442
    %v444 = vpop.xlane.xlu0 %443
    %v445 = vsel %vm441, %v297, -inf
    %446 = vmax.xlane.f32.xlu0 %v445
    %v447 = vpop.xlane.xlu0 %446
    %v448 = vsel %vm441, %v341, -inf
    %449 = vmax.xlane.f32.xlu0 %v448
    %v450 = vpop.xlane.xlu0 %449
    %v451 = vsel %vm441, %v344, -inf
    %452 = vmax.xlane.f32.xlu0 %v451
    %v453 = vpop.xlane.xlu0 %452
    %v454 = vsel %vm441, %v388, -inf
    %455 = vmax.xlane.f32.xlu0 %v454
    %v456 = vpop.xlane.xlu0 %455
    %v457 = vsel %vm441, %v391, -inf
    %458 = vmax.xlane.f32.xlu0 %v457
    %v459 = vpop.xlane.xlu0 %458
    %v460 = vsel %vm441, %v435, -inf
    %461 = vmax.xlane.f32.xlu0 %v460
    %v462 = vpop.xlane.xlu0 %461
    %v463 = vsel %vm441, %v438, -inf
    %464 = vmax.xlane.f32.xlu0 %v463
    %v465 = vpop.xlane.xlu0 %464
    %v466 = vsub.f32 %v294, %v444
    %v467 = vsub.f32 %v297, %v447
    %v468 = vsub.f32 %v341, %v450
    %v469 = vsub.f32 %v344, %v453
    %v470 = vsub.f32 %v388, %v456
    %v471 = vsub.f32 %v391, %v459
    %v472 = vsub.f32 %v435, %v462
    %v473 = vsub.f32 %v438, %v465
    %v474 = vmul.f32 %v466, 1.442695
    %v475 = vpow.pop %v474
    %v476 = vmul.f32 %v467, 1.442695
    %v477 = vpow.pop %v476
    %v478 = vmul.f32 %v468, 1.442695
    %v479 = vpow.pop %v478
    %v480 = vmul.f32 %v469, 1.442695
    %v481 = vpow.pop %v480
    %v482 = vmul.f32 %v470, 1.442695
    %v483 = vpow.pop %v482
    %v484 = vmul.f32 %v471, 1.442695
    %v485 = vpow.pop %v484
    %v486 = vmul.f32 %v472, 1.442695
    %v487 = vpow.pop %v486
    %v488 = vmul.f32 %v473, 1.442695
    %v489 = vpow.pop %v488
    %v490 = vsel %vm441, %v475, 0.0
    %491 = vadd.xlane.f32.xlu0 %v490
    %v492 = vpop.xlane.xlu0 %491
    %v493 = vsel %vm441, %v477, 0.0
    %494 = vadd.xlane.f32.xlu0 %v493
    %v495 = vpop.xlane.xlu0 %494
    %v496 = vsel %vm441, %v479, 0.0
    %497 = vadd.xlane.f32.xlu0 %v496
    %v498 = vpop.xlane.xlu0 %497
    %v499 = vsel %vm441, %v481, 0.0
    %500 = vadd.xlane.f32.xlu0 %v499
    %v501 = vpop.xlane.xlu0 %500
    %v502 = vsel %vm441, %v483, 0.0
    %503 = vadd.xlane.f32.xlu0 %v502
    %v504 = vpop.xlane.xlu0 %503
    %v505 = vsel %vm441, %v485, 0.0
    %506 = vadd.xlane.f32.xlu0 %v505
    %v507 = vpop.xlane.xlu0 %506
    %v508 = vsel %vm441, %v487, 0.0
    %509 = vadd.xlane.f32.xlu0 %v508
    %v510 = vpop.xlane.xlu0 %509
    %v511 = vsel %vm441, %v489, 0.0
    %512 = vadd.xlane.f32.xlu0 %v511
    %v513 = vpop.xlane.xlu0 %512
    %v514 = vrcp.pop %v492
    %v515 = vrcp.pop %v495
    %v516 = vrcp.pop %v498
    %v517 = vrcp.pop %v501
    %v518 = vrcp.pop %v504
    %v519 = vrcp.pop %v507
    %v520 = vrcp.pop %v510
    %v521 = vrcp.pop %v513
    %v522 = vmul.f32 %v475, %v514
    %v523 = vmul.f32 %v477, %v515
    %v524 = vmul.f32 %v479, %v516
    %v525 = vmul.f32 %v481, %v517
    %v526 = vmul.f32 %v483, %v518
    %v527 = vmul.f32 %v485, %v519
    %v528 = vmul.f32 %v487, %v520
    %v529 = vmul.f32 %v489, %v521
    %v530 = vpack.c.bf16 %v523, %v522
    %v531 = vpack.c.bf16 %v525, %v524
    %v532 = vpack.c.bf16 %v527, %v526
    %v533 = vpack.c.bf16 %v529, %v528
    %v535 = vsel %vm441, %v530, 0
    %537 = vmatprep.subr.bf16.mxu0 0
    %538 = vmatpush1.bf16.msra.mxu0 %v241
    %539 = vmatprep.subr.bf16.mxu0 0
    %540 = vmatpush1.bf16.msra.mxu0 0
    %541 = vmatprep.subr.bf16.mxu0 0
    %542 = vmatpush1.bf16.msra.mxu0 0
    %543 = vmatprep.subr.bf16.mxu0 0
    %544 = vmatpush1.bf16.msra.mxu0 0
    %545 = vmatprep.subr.bf16.mxu0 0
    %546 = vmatpush1.bf16.msra.mxu0 0
    %547 = vmatprep.subr.bf16.mxu0 0
    %548 = vmatpush1.bf16.msra.mxu0 0
    %549 = vmatprep.subr.bf16.mxu0 0
    %550 = vmatpush1.bf16.msra.mxu0 0
    %551 = vmatprep.subr.bf16.mxu0 0
    %552 = vmatpush1.bf16.msra.mxu0 0
    %553 = vmatprep.subr.bf16.mxu0 0
    %554 = vmatpush1.bf16.msra.mxu0 0
    %555 = vmatprep.subr.bf16.mxu0 0
    %556 = vmatpush1.bf16.msra.mxu0 0
    %557 = vmatprep.subr.bf16.mxu0 0
    %558 = vmatpush1.bf16.msra.mxu0 0
    %559 = vmatprep.subr.bf16.mxu0 0
    %560 = vmatpush1.bf16.msra.mxu0 0
    %561 = vmatprep.subr.bf16.mxu0 0
    %562 = vmatpush1.bf16.msra.mxu0 0
    %563 = vmatprep.subr.bf16.mxu0 0
    %564 = vmatpush1.bf16.msra.mxu0 0
    %565 = vmatprep.subr.bf16.mxu0 0
    %566 = vmatpush1.bf16.msra.mxu0 0
    %567 = vmatprep.subr.bf16.mxu0 0
    %568 = vmatpush1.bf16.msra.mxu0 0
    %569 = vmatprep.mubr.bf16.mxu0 0
    %570 = vmatmul.mubr.bf16.gmra.mrb[0].mxu0 %v535
    %v571 = vpop.f32.mrb[0].mxu0
    %v572 = vadd.f32 0.0, %v571
    %v573 = vpop.f32.mrb[0].mxu0
    %v574 = vpop.f32.mrb[0].mxu0
    %v575 = vadd.f32 0.0, %v574
    %v576 = vpop.f32.mrb[0].mxu0
    %577 = vdwg.mxu0
    %v579 = vsel %vm441, %v531, 0
    %581 = vmatprep.subr.bf16.mxu0 0
    %582 = vmatpush1.bf16.msra.mxu0 %v242
    %583 = vmatprep.subr.bf16.mxu0 0
    %584 = vmatpush1.bf16.msra.mxu0 0
    %585 = vmatprep.subr.bf16.mxu0 0
    %586 = vmatpush1.bf16.msra.mxu0 0
    %587 = vmatprep.subr.bf16.mxu0 0
    %588 = vmatpush1.bf16.msra.mxu0 0
    %589 = vmatprep.subr.bf16.mxu0 0
    %590 = vmatpush1.bf16.msra.mxu0 0
    %591 = vmatprep.subr.bf16.mxu0 0
    %592 = vmatpush1.bf16.msra.mxu0 0
    %593 = vmatprep.subr.bf16.mxu0 0
    %594 = vmatpush1.bf16.msra.mxu0 0
    %595 = vmatprep.subr.bf16.mxu0 0
    %596 = vmatpush1.bf16.msra.mxu0 0
    %597 = vmatprep.subr.bf16.mxu0 0
    %598 = vmatpush1.bf16.msra.mxu0 0
    %599 = vmatprep.subr.bf16.mxu0 0
    %600 = vmatpush1.bf16.msra.mxu0 0
    %601 = vmatprep.subr.bf16.mxu0 0
    %602 = vmatpush1.bf16.msra.mxu0 0
    %603 = vmatprep.subr.bf16.mxu0 0
    %604 = vmatpush1.bf16.msra.mxu0 0
    %605 = vmatprep.subr.bf16.mxu0 0
    %606 = vmatpush1.bf16.msra.mxu0 0
    %607 = vmatprep.subr.bf16.mxu0 0
    %608 = vmatpush1.bf16.msra.mxu0 0
    %609 = vmatprep.subr.bf16.mxu0 0
    %610 = vmatpush1.bf16.msra.mxu0 0
    %611 = vmatprep.subr.bf16.mxu0 0
    %612 = vmatpush1.bf16.msra.mxu0 0
    %613 = vmatprep.mubr.bf16.mxu0 0
    %614 = vmatmul.mubr.bf16.gmra.mrb[0].mxu0 %v579
    %v615 = vpop.f32.mrb[0].mxu0
    %v616 = vadd.f32 0.0, %v615
    %v617 = vpop.f32.mrb[0].mxu0
    %v618 = vpop.f32.mrb[0].mxu0
    %v619 = vadd.f32 0.0, %v618
    %v620 = vpop.f32.mrb[0].mxu0
    %621 = vdwg.mxu0
    %v623 = vsel %vm441, %v532, 0
    %625 = vmatprep.subr.bf16.mxu0 0
    %626 = vmatpush1.bf16.msra.mxu0 %v243
    %627 = vmatprep.subr.bf16.mxu0 0
    %628 = vmatpush1.bf16.msra.mxu0 0
    %629 = vmatprep.subr.bf16.mxu0 0
    %630 = vmatpush1.bf16.msra.mxu0 0
    %631 = vmatprep.subr.bf16.mxu0 0
    %632 = vmatpush1.bf16.msra.mxu0 0
    %633 = vmatprep.subr.bf16.mxu0 0
    %634 = vmatpush1.bf16.msra.mxu0 0
    %635 = vmatprep.subr.bf16.mxu0 0
    %636 = vmatpush1.bf16.msra.mxu0 0
    %637 = vmatprep.subr.bf16.mxu0 0
    %638 = vmatpush1.bf16.msra.mxu0 0
    %639 = vmatprep.subr.bf16.mxu0 0
    %640 = vmatpush1.bf16.msra.mxu0 0
    %641 = vmatprep.subr.bf16.mxu0 0
    %642 = vmatpush1.bf16.msra.mxu0 0
    %643 = vmatprep.subr.bf16.mxu0 0
    %644 = vmatpush1.bf16.msra.mxu0 0
    %645 = vmatprep.subr.bf16.mxu0 0
    %646 = vmatpush1.bf16.msra.mxu0 0
    %647 = vmatprep.subr.bf16.mxu0 0
    %648 = vmatpush1.bf16.msra.mxu0 0
    %649 = vmatprep.subr.bf16.mxu0 0
    %650 = vmatpush1.bf16.msra.mxu0 0
    %651 = vmatprep.subr.bf16.mxu0 0
    %652 = vmatpush1.bf16.msra.mxu0 0
    %653 = vmatprep.subr.bf16.mxu0 0
    %654 = vmatpush1.bf16.msra.mxu0 0
    %655 = vmatprep.subr.bf16.mxu0 0
    %656 = vmatpush1.bf16.msra.mxu0 0
    %657 = vmatprep.mubr.bf16.mxu0 0
    %658 = vmatmul.mubr.bf16.gmra.mrb[0].mxu0 %v623
    %v659 = vpop.f32.mrb[0].mxu0
    %v660 = vadd.f32 0.0, %v659
    %v661 = vpop.f32.mrb[0].mxu0
    %v662 = vpop.f32.mrb[0].mxu0
    %v663 = vadd.f32 0.0, %v662
    %v664 = vpop.f32.mrb[0].mxu0
    %665 = vdwg.mxu0
    %v667 = vsel %vm441, %v533, 0
    %669 = vmatprep.subr.bf16.mxu0 0
    %670 = vmatpush1.bf16.msra.mxu0 %v244
    %671 = vmatprep.subr.bf16.mxu0 0
    %672 = vmatpush1.bf16.msra.mxu0 0
    %673 = vmatprep.subr.bf16.mxu0 0
    %674 = vmatpush1.bf16.msra.mxu0 0
    %675 = vmatprep.subr.bf16.mxu0 0
    %676 = vmatpush1.bf16.msra.mxu0 0
    %677 = vmatprep.subr.bf16.mxu0 0
    %678 = vmatpush1.bf16.msra.mxu0 0
    %679 = vmatprep.subr.bf16.mxu0 0
    %680 = vmatpush1.bf16.msra.mxu0 0
    %681 = vmatprep.subr.bf16.mxu0 0
    %682 = vmatpush1.bf16.msra.mxu0 0
    %683 = vmatprep.subr.bf16.mxu0 0
    %684 = vmatpush1.bf16.msra.mxu0 0
    %685 = vmatprep.subr.bf16.mxu0 0
    %686 = vmatpush1.bf16.msra.mxu0 0
    %687 = vmatprep.subr.bf16.mxu0 0
    %688 = vmatpush1.bf16.msra.mxu0 0
    %689 = vmatprep.subr.bf16.mxu0 0
    %690 = vmatpush1.bf16.msra.mxu0 0
    %691 = vmatprep.subr.bf16.mxu0 0
    %692 = vmatpush1.bf16.msra.mxu0 0
    %693 = vmatprep.subr.bf16.mxu0 0
    %694 = vmatpush1.bf16.msra.mxu0 0
    %695 = vmatprep.subr.bf16.mxu0 0
    %696 = vmatpush1.bf16.msra.mxu0 0
    %697 = vmatprep.subr.bf16.mxu0 0
    %698 = vmatpush1.bf16.msra.mxu0 0
    %699 = vmatprep.subr.bf16.mxu0 0
    %700 = vmatpush1.bf16.msra.mxu0 0
    %701 = vmatprep.mubr.bf16.mxu0 0
    %702 = vmatmul.mubr.bf16.gmra.mrb[0].mxu0 %v667
    %v703 = vpop.f32.mrb[0].mxu0
    %v704 = vadd.f32 0.0, %v703
    %v705 = vpop.f32.mrb[0].mxu0
    %v706 = vpop.f32.mrb[0].mxu0
    %v707 = vadd.f32 0.0, %v706
    %v708 = vpop.f32.mrb[0].mxu0
    %709 = vdwg.mxu0
    %v710 = vpack.c.bf16 %v575, %v572
    %v711 = vpack.c.bf16 %v619, %v616
    %v712 = vpack.c.bf16 %v663, %v660
    %v713 = vpack.c.bf16 %v707, %v704
    %714 = vst.msk [vmem:[#allocation5] sm:$0xff] %vm177, %v710
    %716 = vrot.lane.b32.xlu0 %v711, 8
    %v717 = vpop.permute.xlu0 %716
    %vm719 = vcmask 130112
    %720 = vst.msk [vmem:[#allocation5] sm:$0xff] %vm719, %v717
    %722 = vrot.lane.b32.xlu0 %v712, 16
    %v723 = vpop.permute.xlu0 %722
    %vm725 = vcmask 195712
    %726 = vst.msk [vmem:[#allocation5] sm:$0xff] %vm725, %v723
    %728 = vrot.lane.b32.xlu0 %v713, 24
    %v729 = vpop.permute.xlu0 %728
    %vm731 = vcmask 261312
    %732 = vst.msk [vmem:[#allocation5] sm:$0xff] %vm731, %v729
    %v733 = vld [vmem:[#allocation5] sm:$0xff]
    %v734 = vld [vmem:[#allocation11] sm:$0xf]
    %v735 = vld [vmem:[#allocation11 + $0x4] sm:$0xf]
    %v736 = vld [vmem:[#allocation11 + $0x8] sm:$0xf]
    %v737 = vld [vmem:[#allocation11 + $0xc] sm:$0xf]
    %v742 = vunpack.c.l.b16 %v734
    %v743 = vunpack.c.l.b16 %v735
    %v744 = vunpack.c.l.b16 %v736
    %v745 = vunpack.c.l.b16 %v737
    %v746 = vpack.c.b16 %v743, %v742
    %v747 = vpack.c.b16 %v745, %v744
    %v751 = vsel %vm90, %v733, 0
    %753 = vmatprep.subr.bf16.mxu0 0
    %754 = vmatpush1.bf16.msra.mxu0 %v746
    %755 = vmatprep.subr.bf16.mxu0 0
    %756 = vmatpush1.bf16.msra.mxu0 %v747
    %757 = vmatprep.subr.bf16.mxu0 0
    %758 = vmatpush1.bf16.msra.mxu0 0
    %759 = vmatprep.subr.bf16.mxu0 0
    %760 = vmatpush1.bf16.msra.mxu0 0
    %761 = vmatprep.subr.bf16.mxu0 0
    %762 = vmatpush1.bf16.msra.mxu0 0
    %763 = vmatprep.subr.bf16.mxu0 0
    %764 = vmatpush1.bf16.msra.mxu0 0
    %765 = vmatprep.subr.bf16.mxu0 0
    %766 = vmatpush1.bf16.msra.mxu0 0
    %767 = vmatprep.subr.bf16.mxu0 0
    %768 = vmatpush1.bf16.msra.mxu0 0
    %769 = vmatprep.subr.bf16.mxu0 0
    %770 = vmatpush1.bf16.msra.mxu0 0
    %771 = vmatprep.subr.bf16.mxu0 0
    %772 = vmatpush1.bf16.msra.mxu0 0
    %773 = vmatprep.subr.bf16.mxu0 0
    %774 = vmatpush1.bf16.msra.mxu0 0
    %775 = vmatprep.subr.bf16.mxu0 0
    %776 = vmatpush1.bf16.msra.mxu0 0
    %777 = vmatprep.subr.bf16.mxu0 0
    %778 = vmatpush1.bf16.msra.mxu0 0
    %779 = vmatprep.subr.bf16.mxu0 0
    %780 = vmatpush1.bf16.msra.mxu0 0
    %781 = vmatprep.subr.bf16.mxu0 0
    %782 = vmatpush1.bf16.msra.mxu0 0
    %783 = vmatprep.subr.bf16.mxu0 0
    %784 = vmatpush1.bf16.msra.mxu0 0
    %785 = vmatprep.mubr.bf16.mxu0 0
    %786 = vmatmul.mubr.bf16.gmra.mrb[0].mxu0 %v751
    %v787 = vpop.f32.mrb[0].mxu0
    %v788 = vadd.f32 0.0, %v787
    %v789 = vpop.f32.mrb[0].mxu0
    %v790 = vpop.f32.mrb[0].mxu0
    %v791 = vadd.f32 0.0, %v790
    %v792 = vpop.f32.mrb[0].mxu0
    %793 = vdwg.mxu0
    %v794 = vadd.f32 %v86, %v788
    %v795 = vadd.f32 %v87, %v791
    %v796 = vmul.f32 %v794, %v794
    %v797 = vmul.f32 %v795, %v795
    %v798 = vsel %vm90, %v796, 0.0
    %799 = vadd.xlane.f32.xlu0 %v798
    %v800 = vpop.xlane.xlu0 %799
    %v801 = vsel %vm90, %v797, 0.0
    %802 = vadd.xlane.f32.xlu0 %v801
    %v803 = vpop.xlane.xlu0 %802
    %v804 = vmul.f32 %v800, %v97
    %v805 = vmul.f32 %v803, %v97
    %v806 = vadd.f32 %v804, 1e-06
    %v807 = vadd.f32 %v805, 1e-06
    %v808 = vrsqrt.pop %v806
    %v809 = vrsqrt.pop %v807
    %v810 = vmul.f32 %v794, %v808
    %v811 = vmul.f32 %v795, %v809
    %v812 = vld [vmem:[%s5] sm:$0x1]
    %v814 = vlaneseq
    %v815 = vshrl.u32 %v814, 7
    %v816 = vsub.s32 0, %v815
    %v817 = vrot.slane %v812, %v816
    %v819 = vmul.f32 %v810, %v817
    %v820 = vmul.f32 %v811, %v817
    %v821 = vpack.c.bf16 %v820, %v819
    %v822 = vld [vmem:[#allocation12] sm:$0xf]
    %v823 = vld [vmem:[#allocation12 + $0x4] sm:$0xf]
    %v824 = vld [vmem:[#allocation12 + $0x8] sm:$0xf]
    %v825 = vld [vmem:[#allocation12 + $0xc] sm:$0xf]
    %v830 = vunpack.c.l.b16 %v822
    %v831 = vunpack.c.l.b16 %v823
    %v832 = vunpack.c.l.b16 %v824
    %v833 = vunpack.c.l.b16 %v825
    %v834 = vpack.c.b16 %v831, %v830
    %v835 = vpack.c.b16 %v833, %v832
    %v839 = vsel %vm90, %v821, 0
    %841 = vmatprep.subr.bf16.mxu0 0
    %842 = vmatpush1.bf16.msra.mxu0 %v834
    %843 = vmatprep.subr.bf16.mxu0 0
    %844 = vmatpush1.bf16.msra.mxu0 %v835
    %845 = vmatprep.subr.bf16.mxu0 0
    %846 = vmatpush1.bf16.msra.mxu0 0
    %847 = vmatprep.subr.bf16.mxu0 0
    %848 = vmatpush1.bf16.msra.mxu0 0
    %849 = vmatprep.subr.bf16.mxu0 0
    %850 = vmatpush1.bf16.msra.mxu0 0
    %851 = vmatprep.subr.bf16.mxu0 0
    %852 = vmatpush1.bf16.msra.mxu0 0
    %853 = vmatprep.subr.bf16.mxu0 0
    %854 = vmatpush1.bf16.msra.mxu0 0
    %855 = vmatprep.subr.bf16.mxu0 0
    %856 = vmatpush1.bf16.msra.mxu0 0
    %857 = vmatprep.subr.bf16.mxu0 0
    %858 = vmatpush1.bf16.msra.mxu0 0
    %859 = vmatprep.subr.bf16.mxu0 0
    %860 = vmatpush1.bf16.msra.mxu0 0
    %861 = vmatprep.subr.bf16.mxu0 0
    %862 = vmatpush1.bf16.msra.mxu0 0
    %863 = vmatprep.subr.bf16.mxu0 0
    %864 = vmatpush1.bf16.msra.mxu0 0
    %865 = vmatprep.subr.bf16.mxu0 0
    %866 = vmatpush1.bf16.msra.mxu0 0
    %867 = vmatprep.subr.bf16.mxu0 0
    %868 = vmatpush1.bf16.msra.mxu0 0
    %869 = vmatprep.subr.bf16.mxu0 0
    %870 = vmatpush1.bf16.msra.mxu0 0
    %871 = vmatprep.subr.bf16.mxu0 0
    %872 = vmatpush1.bf16.msra.mxu0 0
    %873 = vmatprep.mubr.bf16.mxu0 0
    %874 = vmatmul.mubr.bf16.gmra.mrb[0].mxu0 %v839
    %v875 = vpop.f32.mrb[0].mxu0
    %v876 = vadd.f32 0.0, %v875
    %v877 = vpop.f32.mrb[0].mxu0
    %v878 = vpop.f32.mrb[0].mxu0
    %v879 = vadd.f32 0.0, %v878
    %v880 = vpop.f32.mrb[0].mxu0
    %881 = vdwg.mxu0
    %v882 = vmax.f32 %v876, 0.0
    %v883 = vmax.f32 %v879, 0.0
    %v884 = vpack.c.bf16 %v883, %v882
    %v885 = vld [vmem:[%s7] sm:$0xf]
    %v886 = vld [vmem:[%s7 + $0x4] sm:$0xf]
    %v887 = vld [vmem:[%s7 + $0x8] sm:$0xf]
    %v888 = vld [vmem:[%s7 + $0xc] sm:$0xf]
    %v889 = vld [vmem:[%s7 + $0x10] sm:$0xf]
    %v890 = vld [vmem:[%s7 + $0x14] sm:$0xf]
    %v891 = vld [vmem:[%s7 + $0x18] sm:$0xf]
    %v892 = vld [vmem:[%s7 + $0x1c] sm:$0xf]
    %v901 = vunpack.c.l.b16 %v885
    %v902 = vunpack.c.l.b16 %v886
    %v903 = vunpack.c.l.b16 %v887
    %v904 = vunpack.c.l.b16 %v888
    %v905 = vunpack.c.l.b16 %v889
    %v906 = vunpack.c.l.b16 %v890
    %v907 = vunpack.c.l.b16 %v891
    %v908 = vunpack.c.l.b16 %v892
    %v909 = vpack.c.b16 %v902, %v901
    %v910 = vpack.c.b16 %v904, %v903
    %v911 = vpack.c.b16 %v906, %v905
    %v912 = vpack.c.b16 %v908, %v907
    %vm917 = vcmask 523264
    %v919 = vsel %vm917, %v884, 0
    %921 = vmatprep.subr.bf16.mxu0 0
    %922 = vmatpush1.bf16.msra.mxu0 %v909
    %923 = vmatprep.subr.bf16.mxu0 0
    %924 = vmatpush1.bf16.msra.mxu0 %v910
    %925 = vmatprep.subr.bf16.mxu0 0
    %926 = vmatpush1.bf16.msra.mxu0 %v911
    %927 = vmatprep.subr.bf16.mxu0 0
    %928 = vmatpush1.bf16.msra.mxu0 %v912
    %929 = vmatprep.subr.bf16.mxu0 0
    %930 = vmatpush1.bf16.msra.mxu0 0
    %931 = vmatprep.subr.bf16.mxu0 0
    %932 = vmatpush1.bf16.msra.mxu0 0
    %933 = vmatprep.subr.bf16.mxu0 0
    %934 = vmatpush1.bf16.msra.mxu0 0
    %935 = vmatprep.subr.bf16.mxu0 0
    %936 = vmatpush1.bf16.msra.mxu0 0
    %937 = vmatprep.subr.bf16.mxu0 0
    %938 = vmatpush1.bf16.msra.mxu0 0
    %939 = vmatprep.subr.bf16.mxu0 0
    %940 = vmatpush1.bf16.msra.mxu0 0
    %941 = vmatprep.subr.bf16.mxu0 0
    %942 = vmatpush1.bf16.msra.mxu0 0
    %943 = vmatprep.subr.bf16.mxu0 0
    %944 = vmatpush1.bf16.msra.mxu0 0
    %945 = vmatprep.subr.bf16.mxu0 0
    %946 = vmatpush1.bf16.msra.mxu0 0
    %947 = vmatprep.subr.bf16.mxu0 0
    %948 = vmatpush1.bf16.msra.mxu0 0
    %949 = vmatprep.subr.bf16.mxu0 0
    %950 = vmatpush1.bf16.msra.mxu0 0
    %951 = vmatprep.subr.bf16.mxu0 0
    %952 = vmatpush1.bf16.msra.mxu0 0
    %953 = vmatprep.mubr.bf16.mxu0 0
    %954 = vmatmul.mubr.bf16.gmra.mrb[0].mxu0 %v919
    %v955 = vpop.f32.mrb[0].mxu0
    %v956 = vadd.f32 0.0, %v955
    %v957 = vpop.f32.mrb[0].mxu0
    %v958 = vpop.f32.mrb[0].mxu0
    %v959 = vadd.f32 0.0, %v958
    %v960 = vpop.f32.mrb[0].mxu0
    %961 = vdwg.mxu0
    %v962 = vadd.f32 %v794, %v956
    %v963 = vadd.f32 %v795, %v959
    %964 = vst.msk [vmem:[#allocation14] sm:$0xff] %vm90, %v962
    %965 = vst.msk [vmem:[#allocation14 + $0x8] sm:$0xff] %vm90, %v963
    // Predicated region
    $region50: #{t5_block_forward.1} parent=1 // pred_check
      _
    $region51: #{t5_block_forward.1} parent=1 // pred_check_branch
      %967 = sbr.rel (0) target = $region53
    $region52: #{t5_block_forward.1} parent=1 // pred_region
      %s969 = ssub.s32 256, 256
      %970 = vsyncadd [#allocation8], %s969
      %s971 = sshll.u32 [#allocation14], 4
      %s972 = int_to_ptr.vmem [resolvable:$true] %s971
      %977 = dma.vmem_to_hbm [thread:$0]  %s972, 256, %s8, [#allocation8], 128, 128, 8
    $region53: #{t5_block_forward.1} parent=1 // pred_fallthru
      _
    // Predicated region
    $region54: #{t5_block_forward.1} parent=1 // pred_check
      _
    $region55: #{t5_block_forward.1} parent=1 // pred_check_branch
      %979 = sbr.rel (0) target = $region57
    $region56: #{t5_block_forward.1} parent=1 // pred_region
      %980 = dma.done [#allocation8], 256
    $region57: #{t5_block_forward.1} parent=1 // pred_fallthru
      _
    %981 = vsyncpa [#allocation7], 1
    %982 = vsyncpa [#allocation10], 1
    %983 = vsyncpa [#allocation13], 1
    %984 = vsyncpa [#allocation8], 1

</llo_original>
